<compile_context>
chip_gen: v7x
topology: tpu7x:2x2x1
jax: 0.10.0
libtpu: 0.0.40
codegen_flags: <defaults>
</compile_context>

<pallas_src>
import jax
import jax.numpy as jnp
from jax import lax
from jax.experimental import pallas as pl
from jax.experimental.pallas import tpu as pltpu

EPS = 1e-5  # nn.BatchNorm2d default


# --------------------------------------------------------------------------- #
# kernels
# --------------------------------------------------------------------------- #
def conv_stats_kernel(x_ref, w_ref, y_ref, sum_ref, sq_ref):
    """3x3 conv on one tile of images + per-channel partial sum / sum-of-squares.

    x_ref : (nb, H+2, (W+2)*C_in)        bf16  padded NHWC rows (W, C_in folded)
    w_ref : (3*(W+2)*C_in, W*C_out)      bf16  kh-flattened row-Toeplitz weight
    y_ref : (nb*H, W*C_out)              bf16  lane-dense conv output tile
    sum_ref, sq_ref : (8, W*C_out)       f32   this step's partial stats block
    """
    nb, hp, wpc = x_ref.shape
    h = hp - 2
    rows = nb * h

    # Stage the 3 H-shifted taps contiguously along the contraction axis so the
    # conv is ONE K = 3*(W+2)*C_in MXU matmul instead of 3 under-filled K=WpC
    # passes (cuts MXU pushes ~3x on v6e/v7x and drops the extra f32 acc adds).
    lhs = jnp.concatenate(
        [x_ref[:, kh:kh + h, :].reshape(rows, wpc) for kh in range(3)], axis=-1)
    acc = jnp.dot(lhs, w_ref[...], preferred_element_type=jnp.float32)

    # bf16 intermediate halves the conv writeback + mem-bound BN-pass read.
    y_ref[...] = acc.astype(y_ref.dtype)

    # True 8-way sublane partials (glue sums the 8 rows of every step's block).
    wc = acc.shape[-1]
    if rows % 8 == 0:
        sum_ref[...] = acc.reshape(rows // 8, 8, wc).sum(axis=0)
        sq_ref[...] = (acc * acc).reshape(rows // 8, 8, wc).sum(axis=0)
    else:  # non-sublane-aligned row count: put the full sum in row 0
        z = jnp.zeros((7, wc), jnp.float32)
        sum_ref[...] = jnp.concatenate(
            [jnp.sum(acc, axis=0, keepdims=True), z], axis=0)
        sq_ref[...] = jnp.concatenate(
            [jnp.sum(acc * acc, axis=0, keepdims=True), z], axis=0)


def bn_relu_kernel(y_ref, scale_ref, shift_ref, o_ref):
    """Fused affine-normalize + ReLU (lane-dense; bf16 read, f32 write)."""
    o_ref[...] = jnp.maximum(
        y_ref[...].astype(jnp.float32) * scale_ref[...] + shift_ref[...], 0.0)


# --------------------------------------------------------------------------- #
# tiling helpers (all static shape logic)
# --------------------------------------------------------------------------- #
def _dual_tensorcore():
    """True when the chip has 2 TensorCores that 'parallel' axes shard across."""
    try:
        kind = jax.devices()[0].device_kind.lower()
    except Exception:
        return False
    return "v7" in kind


def _conv_tile_bytes(nb, h, w, c_in, c_out):
    wpc, wc, rows = (w + 2) * c_in, w * c_out, nb * h
    x_blk = nb * (h + 2) * wpc * 2          # bf16 input block
    y_blk = rows * wc * 2                   # bf16 output block
    w_blk = 3 * wpc * wc * 2                # Toeplitz weight block
    st_blk = 2 * 8 * wc * 4                 # stats blocks
    lhs = rows * 3 * wpc * 2                # staged contraction operand
    return 2 * (x_blk + y_blk + w_blk + st_blk) + lhs   # pipeline double-buffers


def _pick_images_per_block(n, h, w, c_in, c_out, dual_tc,
                           target_pixels=64 * 1024, vmem_budget=40 << 20):
    """Largest divisor of n whose conv tile stays under the pixel / VMEM budget.
    On dual-TensorCore chips prefer >= 2 grid steps so both cores get work."""
    def ok(nb, need_split):
        if n % nb:
            return False
        if need_split and nb == n and n > 1:
            return False
        if nb * h * w > target_pixels:
            return False
        if _conv_tile_bytes(nb, h, w, c_in, c_out) > vmem_budget:
            return False
        if (nb * h) % 8 and nb != n:        # (8,128) block constraint
            return False
        return True

    for need_split in ((True, False) if dual_tc else (False,)):
        for nb in range(n, 0, -1):
            if ok(nb, need_split):
                return nb
    # TODO(synk): also tile H/W for images where even a single image overflows VMEM.
    return 1


def _pick_row_block(total_rows, wc, vmem_budget=40 << 20):
    for br in range(total_rows, 0, -1):
        if total_rows % br:
            continue
        if br % 8 and br != total_rows:
            continue
        if 2 * br * wc * (2 + 4) > vmem_budget:   # bf16 in + f32 out, double-buffered
            continue
        return br
    return total_rows


# --------------------------------------------------------------------------- #
# wrapper
# --------------------------------------------------------------------------- #
def conv_layer_2d(x, weight, gamma, beta, *, eps=EPS, compute_dtype=jnp.bfloat16):
    """x: (N, C_in, H, W) f32; weight: (C_out, C_in, 3, 3); gamma/beta: (C_out,)."""
    N, C_in, H, W = x.shape
    C_out = weight.shape[0]
    WpC = (W + 2) * C_in
    WC = W * C_out
    K = 3 * WpC
    M = N * H * W

    dual_tc = _dual_tensorcore()

    # ---- glue: NCHW -> padded NHWC rows (cast to bf16 first so this single
    # fused HBM pass moves half the bytes) ---------------------------------------
    # TODO(synk): keep activations NHWC / (N*H, W*C) end-to-end in the model to
    # drop this transpose and the final one (each is an extra HBM round trip).
    x_nhwc = jnp.transpose(x.astype(compute_dtype), (0, 2, 3, 1))
    x_pad = jnp.pad(x_nhwc, ((0, 0), (1, 1), (1, 1), (0, 0)))
    x_rows = x_pad.reshape(N, H + 2, WpC)

    # ---- glue: fold kw taps into a row-Toeplitz weight, flatten kh into K ------
    # w_flat[kh*WpC + wp*C_in + ci, w*C_out + co] = weight[co, ci, kh, wp-w], 0<=wp-w<3
    # TODO(synk): at production shapes (C_out >= 128 lanes, large W) the Toeplitz
    # weight (3*(W+2)*C_in*W*C_out*2 B) blows v7x VMEM and inflates MXU FLOPs;
    # switch to per-tile patch construction with K = 9*C_in there.
    w_hwio = jnp.transpose(weight, (2, 3, 1, 0)).astype(jnp.float32)   # (3,3,Ci,Co)
    sel = (jnp.arange(W + 2)[None, :, None]
           == jnp.arange(W)[None, None, :] + jnp.arange(3)[:, None, None]
           ).astype(jnp.float32)                                       # (3, W+2, W)
    w_toe = jnp.einsum("bvw,abio->aviwo", sel, w_hwio)                 # (3,W+2,Ci,W,Co)
    w_flat = w_toe.reshape(K, WC).astype(compute_dtype)

    # ---- tiling -----------------------------------------------------------------
    nb = _pick_images_per_block(N, H, W, C_in, C_out, dual_tc)
    B = N // nb
    rows_blk = nb * H
    conv_vmem = int(min(_conv_tile_bytes(nb, H, W, C_in, C_out) + (16 << 20), 56 << 20))

    # ---- kernel 1: conv (single K=3*WpC MXU matmul / tile) + partial stats ------
    # Single 'parallel' grid axis; every step writes its own stats block, so on
    # v7x both TensorCores contribute even for odd step counts; on v5e/v6e the
    # largest tile is taken and the loop is sequential with no split overhead.
    y_rows, s_part, sq_part = pl.pallas_call(
        conv_stats_kernel,
        out_shape=(
            jax.ShapeDtypeStruct((N * H, WC), compute_dtype),
            jax.ShapeDtypeStruct((B * 8, WC), jnp.float32),
            jax.ShapeDtypeStruct((B * 8, WC), jnp.float32),
        ),
        grid=(B,),
        in_specs=[
            pl.BlockSpec((nb, H + 2, WpC), lambda t: (t, 0, 0)),
            # TODO(synk): pipeline_mode=pl.Buffered(1) on this grid-invariant
            # weight once it reaches MBs (saves one VMEM copy, no cost).
            pl.BlockSpec((K, WC), lambda t: (0, 0)),
        ],
        out_specs=(
            pl.BlockSpec((rows_blk, WC), lambda t: (t, 0)),
            pl.BlockSpec((8, WC), lambda t: (t, 0)),
            pl.BlockSpec((8, WC), lambda t: (t, 0)),
        ),
        compiler_params=pltpu.CompilerParams(
            dimension_semantics=("parallel",),
            vmem_limit_bytes=conv_vmem),
    )(x_rows, w_flat)

    # ---- glue: fold train-mode batch stats into per-channel scale / shift -------
    ch_sum = s_part.sum(axis=0).reshape(W, C_out).sum(axis=0)
    ch_sq = sq_part.sum(axis=0).reshape(W, C_out).sum(axis=0)
    mean = ch_sum / M
    # TODO(synk): single-pass E[x^2]-E[x]^2 loses precision for very large M /
    # large-mean activations; use a shifted two-level accumulation if this trains.
    var = jnp.maximum(ch_sq / M - mean * mean, 0.0)       # clamp: no rsqrt(<0) NaNs
    inv_std = lax.rsqrt(var + eps)
    scale = gamma.astype(jnp.float32) * inv_std
    shift = beta.astype(jnp.float32) - mean * scale
    scale_t = jnp.tile(scale, W).reshape(1, WC)
    shift_t = jnp.tile(shift, W).reshape(1, WC)

    # ---- kernel 2: fused BN + ReLU (bf16 read, f32 write, lane-dense) -----------
    rows2 = N * H
    br = _pick_row_block(rows2, WC)
    bn_vmem = int(min(2 * br * WC * 6 + (16 << 20), 56 << 20))
    out_rows = pl.pallas_call(
        bn_relu_kernel,
        out_shape=jax.ShapeDtypeStruct((rows2, WC), jnp.float32),
        grid=(rows2 // br,),
        in_specs=[
            pl.BlockSpec((br, WC), lambda i: (i, 0)),
            pl.BlockSpec((1, WC), lambda i: (0, 0)),
            pl.BlockSpec((1, WC), lambda i: (0, 0)),
        ],
        out_specs=pl.BlockSpec((br, WC), lambda i: (i, 0)),
        compiler_params=pltpu.CompilerParams(
            dimension_semantics=("parallel",),
            vmem_limit_bytes=bn_vmem),
    )(y_rows, scale_t, shift_t)

    # ---- glue: back to the module's NCHW interface -------------------------------
    out_nhwc = out_rows.reshape(N, H, W, C_out)
    return jnp.transpose(out_nhwc, (0, 3, 1, 2))


# --------------------------------------------------------------------------- #
# pure-JAX reference (PyTorch train-mode ConvLayer2d forward)
# --------------------------------------------------------------------------- #
def reference(x, weight, gamma, beta, eps=EPS):
    y = lax.conv_general_dilated(
        x, weight, window_strides=(1, 1), padding=((1, 1), (1, 1)),
        dimension_numbers=("NCHW", "OIHW", "NCHW"))
    mean = jnp.mean(y, axis=(0, 2, 3), keepdims=True)
    var = jnp.var(y, axis=(0, 2, 3), keepdims=True)
    yn = (y - mean) * lax.rsqrt(var + eps)
    yn = yn * gamma[None, :, None, None] + beta[None, :, None, None]
    return jnp.maximum(yn, 0.0)


if __name__ == "__main__":
    N, C_in, C_out, H, W = 2, 4, 8, 16, 16

    key = jax.random.PRNGKey(0)
    kx, kw, kg, kb = jax.random.split(key, 4)
    x = jax.random.normal(kx, (N, C_in, H, W), dtype=jnp.float32)
    fan_in = C_in * 3 * 3
    weight = jax.random.normal(kw, (C_out, C_in, 3, 3), dtype=jnp.float32) * (2.0 / fan_in) ** 0.5
    gamma = 1.0 + 0.1 * jax.random.normal(kg, (C_out,), dtype=jnp.float32)
    beta = 0.1 * jax.random.normal(kb, (C_out,), dtype=jnp.float32)

    conv_fn = jax.jit(conv_layer_2d)
    out = jax.block_until_ready(conv_fn(x, weight, gamma, beta))
    ref = jax.block_until_ready(reference(x, weight, gamma, beta))

    assert out.shape == (N, C_out, H, W)
    # bf16 matmul operands + bf16 intermediate -> bf16-level tolerance vs f32 ref
    assert jnp.allclose(out, ref, rtol=3e-2, atol=3e-2), float(jnp.max(jnp.abs(out - ref)))

    print("KERNEL_OK")
</pallas_src>

<mosaic_0001>
module attributes {stable_mosaic.version = 11 : i64} {
  func.func @conv_stats_kernel(%arg0: i32, %arg1: memref<2x18x72xbf16, #tpu.memory_space<vmem>>, %arg2: memref<216x128xbf16, #tpu.memory_space<vmem>>, %arg3: memref<32x128xbf16, #tpu.memory_space<vmem>>, %arg4: memref<8x128xf32, #tpu.memory_space<vmem>>, %arg5: memref<8x128xf32, #tpu.memory_space<vmem>>) attributes {dimension_semantics = [#tpu.dimension_semantics<parallel>], iteration_bounds = array<i64: 1>, scalar_prefetch = 0 : i64, scratch_operands = 0 : i64, tpu.core_type = #tpu.core_type<tc>, window_params = [{transform_indices = @transform_0, window_bounds = array<i64: 2, 18, 72>}, {pipeline_mode = #tpu.pipeline_mode<synchronous>, transform_indices = @transform_1, window_bounds = array<i64: 216, 128>}, {transform_indices = @transform_2, window_bounds = array<i64: 32, 128>}, {transform_indices = @transform_3, window_bounds = array<i64: 8, 128>}, {transform_indices = @transform_4, window_bounds = array<i64: 8, 128>}]} {
    %c0 = arith.constant 0 : index
    %c0_0 = arith.constant 0 : index
    %c0_1 = arith.constant 0 : index
    %0 = vector.load %arg1[%c0, %c0_0, %c0_1] : memref<2x18x72xbf16, #tpu.memory_space<vmem>>, vector<2x16x72xbf16>
    %1 = vector.shape_cast %0 : vector<2x16x72xbf16> to vector<32x72xbf16>
    %c0_2 = arith.constant 0 : index
    %c1 = arith.constant 1 : index
    %c0_3 = arith.constant 0 : index
    %2 = vector.load %arg1[%c0_2, %c1, %c0_3] : memref<2x18x72xbf16, #tpu.memory_space<vmem>>, vector<2x16x72xbf16>
    %3 = vector.shape_cast %2 : vector<2x16x72xbf16> to vector<32x72xbf16>
    %c0_4 = arith.constant 0 : index
    %c2 = arith.constant 2 : index
    %c0_5 = arith.constant 0 : index
    %4 = vector.load %arg1[%c0_4, %c2, %c0_5] : memref<2x18x72xbf16, #tpu.memory_space<vmem>>, vector<2x16x72xbf16>
    %5 = vector.shape_cast %4 : vector<2x16x72xbf16> to vector<32x72xbf16>
    %6 = tpu.concatenate %1, %3, %5 in 1 : vector<32x72xbf16>, vector<32x72xbf16>, vector<32x72xbf16> -> vector<32x216xbf16>
    %c0_6 = arith.constant 0 : index
    %c0_7 = arith.constant 0 : index
    %7 = vector.load %arg2[%c0_6, %c0_7] : memref<216x128xbf16, #tpu.memory_space<vmem>>, vector<216x128xbf16>
    %cst = arith.constant dense<0.000000e+00> : vector<32x128xf32>
    %8 = tpu.matmul %6, %7, %cst {dimension_numbers = #tpu.dot_dimension_numbers<[1], [0], [0], [1], [0, 0, 1, 1], [], []>} : vector<32x216xbf16>, vector<216x128xbf16>, vector<32x128xf32> -> vector<32x128xf32>
    %9 = arith.truncf %8 : vector<32x128xf32> to vector<32x128xbf16>
    %c0_8 = arith.constant 0 : index
    %c0_9 = arith.constant 0 : index
    %10 = vector.load %arg3[%c0_8, %c0_9] : memref<32x128xbf16, #tpu.memory_space<vmem>>, vector<32x128xbf16>
    tpu.vector_store %arg3[%c0_8, %c0_9], %9 {strides = array<i32>} : memref<32x128xbf16, #tpu.memory_space<vmem>>, vector<32x128xbf16>,
    %11 = vector.shape_cast %8 : vector<32x128xf32> to vector<4x8x128xf32>
    %cst_10 = arith.constant dense<0.000000e+00> : vector<8x128xf32>
    %12 = vector.multi_reduction <add>, %11, %cst_10 [0] : vector<4x8x128xf32> to vector<8x128xf32>
    %c0_11 = arith.constant 0 : index
    %c0_12 = arith.constant 0 : index
    %13 = vector.load %arg4[%c0_11, %c0_12] : memref<8x128xf32, #tpu.memory_space<vmem>>, vector<8x128xf32>
    tpu.vector_store %arg4[%c0_11, %c0_12], %12 {strides = array<i32>} : memref<8x128xf32, #tpu.memory_space<vmem>>, vector<8x128xf32>,
    %14 = arith.mulf %8, %8 : vector<32x128xf32>
    %15 = vector.shape_cast %14 : vector<32x128xf32> to vector<4x8x128xf32>
    %cst_13 = arith.constant dense<0.000000e+00> : vector<8x128xf32>
    %16 = vector.multi_reduction <add>, %15, %cst_13 [0] : vector<4x8x128xf32> to vector<8x128xf32>
    %c0_14 = arith.constant 0 : index
    %c0_15 = arith.constant 0 : index
    %17 = vector.load %arg5[%c0_14, %c0_15] : memref<8x128xf32, #tpu.memory_space<vmem>>, vector<8x128xf32>
    tpu.vector_store %arg5[%c0_14, %c0_15], %16 {strides = array<i32>} : memref<8x128xf32, #tpu.memory_space<vmem>>, vector<8x128xf32>,
    return
  }
  func.func @transform_0(%arg0: i32) -> (i32, i32, i32) {
    %c0_i32 = arith.constant 0 : i32
    %c0_i32_0 = arith.constant 0 : i32
    %c0_i32_1 = arith.constant 0 : i32
    return %arg0, %c0_i32, %c0_i32_0 : i32, i32, i32
  }
  func.func @transform_1(%arg0: i32) -> (i32, i32) {
    %c0_i32 = arith.constant 0 : i32
    %c0_i32_0 = arith.constant 0 : i32
    %c0_i32_1 = arith.constant 0 : i32
    return %c0_i32, %c0_i32_0 : i32, i32
  }
  func.func @transform_2(%arg0: i32) -> (i32, i32) {
    %c0_i32 = arith.constant 0 : i32
    %c0_i32_0 = arith.constant 0 : i32
    return %arg0, %c0_i32 : i32, i32
  }
  func.func @transform_3(%arg0: i32) -> (i32, i32) {
    %c0_i32 = arith.constant 0 : i32
    %c0_i32_0 = arith.constant 0 : i32
    return %arg0, %c0_i32 : i32, i32
  }
  func.func @transform_4(%arg0: i32) -> (i32, i32) {
    %c0_i32 = arith.constant 0 : i32
    %c0_i32_0 = arith.constant 0 : i32
    return %arg0, %c0_i32 : i32, i32
  }
}

module attributes {stable_mosaic.version = 11 : i64} {
  func.func @bn_relu_kernel(%arg0: i32, %arg1: memref<32x128xbf16, #tpu.memory_space<vmem>>, %arg2: memref<1x128xf32, #tpu.memory_space<vmem>>, %arg3: memref<1x128xf32, #tpu.memory_space<vmem>>, %arg4: memref<32x128xf32, #tpu.memory_space<vmem>>) attributes {dimension_semantics = [#tpu.dimension_semantics<parallel>], iteration_bounds = array<i64: 1>, scalar_prefetch = 0 : i64, scratch_operands = 0 : i64, tpu.core_type = #tpu.core_type<tc>, window_params = [{transform_indices = @transform_0, window_bounds = array<i64: 32, 128>}, {pipeline_mode = #tpu.pipeline_mode<synchronous>, transform_indices = @transform_1, window_bounds = array<i64: 1, 128>}, {pipeline_mode = #tpu.pipeline_mode<synchronous>, transform_indices = @transform_2, window_bounds = array<i64: 1, 128>}, {transform_indices = @transform_3, window_bounds = array<i64: 32, 128>}]} {
    %c0 = arith.constant 0 : index
    %c0_0 = arith.constant 0 : index
    %0 = vector.load %arg1[%c0, %c0_0] : memref<32x128xbf16, #tpu.memory_space<vmem>>, vector<32x128xbf16>
    %1 = arith.extf %0 : vector<32x128xbf16> to vector<32x128xf32>
    %c0_1 = arith.constant 0 : index
    %c0_2 = arith.constant 0 : index
    %2 = vector.load %arg2[%c0_1, %c0_2] : memref<1x128xf32, #tpu.memory_space<vmem>>, vector<1x128xf32>
    %3 = vector.broadcast %2 : vector<1x128xf32> to vector<32x128xf32>
    %4 = arith.mulf %1, %3 : vector<32x128xf32>
    %c0_3 = arith.constant 0 : index
    %c0_4 = arith.constant 0 : index
    %5 = vector.load %arg3[%c0_3, %c0_4] : memref<1x128xf32, #tpu.memory_space<vmem>>, vector<1x128xf32>
    %6 = vector.broadcast %5 : vector<1x128xf32> to vector<32x128xf32>
    %7 = arith.addf %4, %6 : vector<32x128xf32>
    %cst = arith.constant 0.000000e+00 : f32
    %8 = vector.broadcast %cst : f32 to vector<32x128xf32>
    %9 = arith.maximumf %7, %8 : vector<32x128xf32>
    %c0_5 = arith.constant 0 : index
    %c0_6 = arith.constant 0 : index
    %10 = vector.load %arg4[%c0_5, %c0_6] : memref<32x128xf32, #tpu.memory_space<vmem>>, vector<32x128xf32>
    tpu.vector_store %arg4[%c0_5, %c0_6], %9 {strides = array<i32>} : memref<32x128xf32, #tpu.memory_space<vmem>>, vector<32x128xf32>,
    return
  }
  func.func @transform_0(%arg0: i32) -> (i32, i32) {
    %c0_i32 = arith.constant 0 : i32
    %c0_i32_0 = arith.constant 0 : i32
    return %arg0, %c0_i32 : i32, i32
  }
  func.func @transform_1(%arg0: i32) -> (i32, i32) {
    %c0_i32 = arith.constant 0 : i32
    %c0_i32_0 = arith.constant 0 : i32
    %c0_i32_1 = arith.constant 0 : i32
    return %c0_i32, %c0_i32_0 : i32, i32
  }
  func.func @transform_2(%arg0: i32) -> (i32, i32) {
    %c0_i32 = arith.constant 0 : i32
    %c0_i32_0 = arith.constant 0 : i32
    %c0_i32_1 = arith.constant 0 : i32
    return %c0_i32, %c0_i32_0 : i32, i32
  }
  func.func @transform_3(%arg0: i32) -> (i32, i32) {
    %c0_i32 = arith.constant 0 : i32
    %c0_i32_0 = arith.constant 0 : i32
    return %arg0, %c0_i32 : i32, i32
  }
}

</mosaic_0001>

<llo_original>
// kernel: tile.13
$region0: #{tile.13}
  #allocation0 [shape = 's32[1]{0}', space=sflag, size = 0x4, scoped, tag = 'scoped memory for tile.13']
  %s0 = inlined_call_operand.vmem [shape: f32[8], index: 0, kind: input, shape index: {}]
  %s1 = inlined_call_operand.vmem [shape: f32[16,8], index: 1, kind: output, shape index: {}]
  // Predicated region
  $region2: #{tile.13} parent=0 // pred_check
    _
  $region3: #{tile.13} parent=0 // pred_check_branch
    %3 = sbr.rel (0) target = $region5
  $region4: #{tile.13} parent=0 // pred_region
    _
  $region5: #{tile.13} parent=0 // pred_fallthru
    _
  %v4 = vld [vmem:[%s0] ss:$0 sm:$0xff]
  %5 = vst [vmem:[%s1] sm:$0xff] %v4
  %s6 = scalar_lea.vmem %s1, 8
  %7 = vst [vmem:[%s6] sm:$0xff] %v4

// kernel: tile.14
$region0: #{tile.14}
  %s0 = inlined_call_operand.vmem [shape: f32[16,8], index: 0, kind: input, shape index: {}]
  %s1 = inlined_call_operand.vmem [shape: f32[1,128], index: 1, kind: output, shape index: {}]
  $region1: #{tile.14} parent=0
    #allocation0 [shape = 'u8[4096]{0}', space=vmem, size = 0x1000, scoped, tag = 'scoped mem for output reshape']
    %v2 = vld [vmem:[%s0] sm:$0x1]
    %vm3 = vcmask 64512
    %4 = vst.msk [vmem:[#allocation0] sm:$0x1] %vm3, %v2
    %s5 = scalar_lea.vmem %s0, 15
    %v6 = vld [vmem:[%s5] sm:$0x1]
    %7 = vrot.lane.b32.xlu0 %v6, 120
    %v8 = vpop.permute.xlu0 %7
    %vm9 = vcmask 1048512
    %10 = vst.msk [vmem:[#allocation0] sm:$0x1] %vm9, %v8
    %s11 = scalar_lea.vmem %s0, 14
    %v12 = vld [vmem:[%s11] sm:$0x1]
    %13 = vrot.lane.b32.xlu0 %v12, 112
    %v14 = vpop.permute.xlu0 %13
    %vm15 = vcmask 982912
    %16 = vst.msk [vmem:[#allocation0] sm:$0x1] %vm15, %v14
    %s17 = scalar_lea.vmem %s0, 13
    %v18 = vld [vmem:[%s17] sm:$0x1]
    %19 = vrot.lane.b32.xlu0 %v18, 104
    %v20 = vpop.permute.xlu0 %19
    %vm21 = vcmask 917312
    %22 = vst.msk [vmem:[#allocation0] sm:$0x1] %vm21, %v20
    %s23 = scalar_lea.vmem %s0, 12
    %v24 = vld [vmem:[%s23] sm:$0x1]
    %25 = vrot.lane.b32.xlu0 %v24, 96
    %v26 = vpop.permute.xlu0 %25
    %vm27 = vcmask 851712
    %28 = vst.msk [vmem:[#allocation0] sm:$0x1] %vm27, %v26
    %s29 = scalar_lea.vmem %s0, 11
    %v30 = vld [vmem:[%s29] sm:$0x1]
    %31 = vrot.lane.b32.xlu0 %v30, 88
    %v32 = vpop.permute.xlu0 %31
    %vm33 = vcmask 786112
    %34 = vst.msk [vmem:[#allocation0] sm:$0x1] %vm33, %v32
    %s35 = scalar_lea.vmem %s0, 10
    %v36 = vld [vmem:[%s35] sm:$0x1]
    %37 = vrot.lane.b32.xlu0 %v36, 80
    %v38 = vpop.permute.xlu0 %37
    %vm39 = vcmask 720512
    %40 = vst.msk [vmem:[#allocation0] sm:$0x1] %vm39, %v38
    %s41 = scalar_lea.vmem %s0, 9
    %v42 = vld [vmem:[%s41] sm:$0x1]
    %43 = vrot.lane.b32.xlu0 %v42, 72
    %v44 = vpop.permute.xlu0 %43
    %vm45 = vcmask 654912
    %46 = vst.msk [vmem:[#allocation0] sm:$0x1] %vm45, %v44
    %s47 = scalar_lea.vmem %s0, 8
    %v48 = vld [vmem:[%s47] sm:$0x1]
    %49 = vrot.lane.b32.xlu0 %v48, 64
    %v50 = vpop.permute.xlu0 %49
    %vm51 = vcmask 589312
    %52 = vst.msk [vmem:[#allocation0] sm:$0x1] %vm51, %v50
    %s53 = scalar_lea.vmem %s0, 7
    %v54 = vld [vmem:[%s53] sm:$0x1]
    %55 = vrot.lane.b32.xlu0 %v54, 56
    %v56 = vpop.permute.xlu0 %55
    %vm57 = vcmask 523712
    %58 = vst.msk [vmem:[#allocation0] sm:$0x1] %vm57, %v56
    %s59 = scalar_lea.vmem %s0, 6
    %v60 = vld [vmem:[%s59] sm:$0x1]
    %61 = vrot.lane.b32.xlu0 %v60, 48
    %v62 = vpop.permute.xlu0 %61
    %vm63 = vcmask 458112
    %64 = vst.msk [vmem:[#allocation0] sm:$0x1] %vm63, %v62
    %s65 = scalar_lea.vmem %s0, 5
    %v66 = vld [vmem:[%s65] sm:$0x1]
    %67 = vrot.lane.b32.xlu0 %v66, 40
    %v68 = vpop.permute.xlu0 %67
    %vm69 = vcmask 392512
    %70 = vst.msk [vmem:[#allocation0] sm:$0x1] %vm69, %v68
    %s71 = scalar_lea.vmem %s0, 4
    %v72 = vld [vmem:[%s71] sm:$0x1]
    %73 = vrot.lane.b32.xlu0 %v72, 32
    %v74 = vpop.permute.xlu0 %73
    %vm75 = vcmask 326912
    %76 = vst.msk [vmem:[#allocation0] sm:$0x1] %vm75, %v74
    %s77 = scalar_lea.vmem %s0, 3
    %v78 = vld [vmem:[%s77] sm:$0x1]
    %79 = vrot.lane.b32.xlu0 %v78, 24
    %v80 = vpop.permute.xlu0 %79
    %vm81 = vcmask 261312
    %82 = vst.msk [vmem:[#allocation0] sm:$0x1] %vm81, %v80
    %s83 = scalar_lea.vmem %s0, 2
    %v84 = vld [vmem:[%s83] sm:$0x1]
    %85 = vrot.lane.b32.xlu0 %v84, 16
    %v86 = vpop.permute.xlu0 %85
    %vm87 = vcmask 195712
    %88 = vst.msk [vmem:[#allocation0] sm:$0x1] %vm87, %v86
    %s89 = scalar_lea.vmem %s0, 1
    %v90 = vld [vmem:[%s89] sm:$0x1]
    %91 = vrot.lane.b32.xlu0 %v90, 8
    %v92 = vpop.permute.xlu0 %91
    %vm93 = vcmask 130112
    %94 = vst.msk [vmem:[#allocation0] sm:$0x1] %vm93, %v92
    %s96 = sshllo.u32 0, 1
    %v98 = vld [vmem:[#allocation0] sm:%s96]
    %s99 = sshllo.u32 0, 1
    %100 = vst [vmem:[%s1] sm:%s99] %v98

// kernel: conv_layer_2d.2
$region0: #{conv_layer_2d.2}
  #allocation0 [shape = 'u32[]', space=smem, size = 0x4, offset = 0x4, fixed_abs, tag = 'smem constant byte address 0x4 - core index']
  #allocation1 [shape = 'u32[144,128]{1,0:T(1,128)}', space=vmem, size = 0x12000, scoped, tag = 'internal scratch']
  %s0 = inlined_call_operand.vmem [shape: bf16[2,18,72], index: 0, kind: input, shape index: {}]
  %s1 = inlined_call_operand.vmem [shape: bf16[216,128], index: 1, kind: input, shape index: {}]
  %s2 = inlined_call_operand.vmem [shape: bf16[32,128], index: 2, kind: output, shape index: {0}]
  %s3 = inlined_call_operand.vmem [shape: f32[8,128], index: 3, kind: output, shape index: {1}]
  %s4 = inlined_call_operand.vmem [shape: f32[8,128], index: 4, kind: output, shape index: {2}]
  %5 = xla_tuple %s2, %s3, %s4
  %s6 = sld [smem:[#allocation0]]
  $region34: #{conv_layer_2d.2} parent=0
    _
  %s8 = ssub.s32 1, %s6
  %s9 = scalar_select 0, %s8, %s6
  // Predicated region
  $region2: #{conv_layer_2d.2} parent=0 // pred_check
    _
  $region3: #{conv_layer_2d.2} parent=0 // pred_check_branch
    %11 = sbr.rel (0) target = $region5
  $region4: #{conv_layer_2d.2} parent=0 // pred_region
    _
  $region5: #{conv_layer_2d.2} parent=0 // pred_fallthru
    _
  // Predicated region
  $region6: #{conv_layer_2d.2} parent=0 // pred_check
    _
  $region7: #{conv_layer_2d.2} parent=0 // pred_check_branch
    %13 = sbr.rel (0) target = $region9
  $region8: #{conv_layer_2d.2} parent=0 // pred_region
    _
  $region9: #{conv_layer_2d.2} parent=0 // pred_fallthru
    _
  %v15 = vld [vmem:[%s0] sm:$0xf]
  %v16 = vld [vmem:[%s0 + $0x4] sm:$0xf]
  %v17 = vld [vmem:[%s0 + $0xc] sm:$0xf]
  %v18 = vld [vmem:[%s0 + $0x10] sm:$0xf]
  %v19 = vld [vmem:[%s0 + $0x8] sm:$0x1]
  %v20 = vld [vmem:[%s0 + $0x14] sm:$0x1]
  %vm21 = vsmask.f32 3328
  %vm22 = vsmask.f32 7440
  %vm23 = vmor %vm21, %vm22
  %v25 = vshrl.u32 %v15, 16
  %v27 = vrot.slane %v25, 4
  %v28 = vshll.u32 %v15, 16
  %v30 = vrot.slane %v28, 5
  %v31 = vor.u32 %v27, %v30
  %v32 = vrot.slane %v31, 4
  %v34 = vshll.u32 %v16, 16
  %v36 = vrot.slane %v34, 5
  %v37 = vsel %vm23, %v32, %v36
  %v38 = vshrl.u32 %v16, 16
  %v40 = vrot.slane %v38, 4
  %v41 = vor.u32 %v40, %v36
  %v42 = vrot.slane %v41, 4
  %v44 = vshll.u32 %v19, 16
  %v46 = vrot.slane %v44, 5
  %v47 = vsel %vm23, %v42, %v46
  %v49 = vshrl.u32 %v17, 16
  %v51 = vrot.slane %v49, 4
  %v52 = vshll.u32 %v17, 16
  %v54 = vrot.slane %v52, 5
  %v55 = vor.u32 %v51, %v54
  %v56 = vrot.slane %v55, 4
  %v58 = vshll.u32 %v18, 16
  %v60 = vrot.slane %v58, 5
  %v61 = vsel %vm23, %v56, %v60
  %v62 = vshrl.u32 %v18, 16
  %v64 = vrot.slane %v62, 4
  %v65 = vor.u32 %v64, %v60
  %v66 = vrot.slane %v65, 4
  %v68 = vshll.u32 %v20, 16
  %v70 = vrot.slane %v68, 5
  %v71 = vsel %vm23, %v66, %v70
  %v72 = vld [vmem:[%s0] sm:$0xe]
  %v73 = vld [vmem:[%s0 + $0xc] sm:$0xe]
  %vm80 = vcmask 1042432
  %vm81 = vcmask 1046532
  %vm82 = vmor %vm80, %vm81
  %v83 = vrot.slane %v72, 5
  %v84 = vrot.slane %v83, 4
  %v85 = vrot.slane %v16, 5
  %v86 = vsel %vm82, %v84, %v85
  %v87 = vrot.slane %v85, 4
  %v88 = vrot.slane %v19, 5
  %v89 = vsel %vm82, %v87, %v88
  %v90 = vrot.slane %v73, 5
  %v91 = vrot.slane %v90, 4
  %v92 = vrot.slane %v18, 5
  %v93 = vsel %vm82, %v91, %v92
  %v94 = vrot.slane %v92, 4
  %v95 = vrot.slane %v20, 5
  %v96 = vsel %vm82, %v94, %v95
  %v99 = vunpack.c.l.b16 %v15
  %v100 = vunpack.c.l.b16 %v16
  %v101 = vunpack.c.l.b16 %v17
  %v102 = vunpack.c.l.b16 %v18
  %v103 = vpack.c.b16 %v100, %v99
  %v104 = vpack.c.b16 %v102, %v101
  %v105 = vunpack.c.l.b16 %v37
  %v106 = vunpack.c.l.b16 %v47
  %v107 = vunpack.c.l.b16 %v61
  %v108 = vunpack.c.l.b16 %v71
  %v109 = vpack.c.b16 %v106, %v105
  %v110 = vpack.c.b16 %v108, %v107
  %111 = vrot.lane.b32.xlu0 %v109, 72
  %v112 = vpop.permute.xlu0 %111
  %113 = vrot.lane.b32.xlu0 %v110, 72
  %v114 = vpop.permute.xlu0 %113
  %v115 = vunpack.c.l.b16 %v86
  %v116 = vunpack.c.l.b16 %v89
  %v117 = vunpack.c.l.b16 %v93
  %v118 = vunpack.c.l.b16 %v96
  %v119 = vpack.c.b16 %v116, %v115
  %v120 = vpack.c.b16 %v118, %v117
  %121 = vrot.lane.b32.xlu0 %v119, 16
  %v122 = vpop.permute.xlu0 %121
  %123 = vrot.lane.b32.xlu0 %v120, 16
  %v124 = vpop.permute.xlu0 %123
  %vm125 = vcmask 588800
  %v128 = vsel %vm125, %v103, %v112
  %v132 = vsel %vm125, %v104, %v114
  %vm134 = vcmask 130048
  %v136 = vsel %vm134, %v112, %v122
  %v138 = vsel %vm134, %v114, %v124
  %v139 = vld [vmem:[%s1] sm:$0xf]
  %v140 = vld [vmem:[%s1 + $0x4] sm:$0xf]
  %v141 = vld [vmem:[%s1 + $0x8] sm:$0xf]
  %v142 = vld [vmem:[%s1 + $0xc] sm:$0xf]
  %v143 = vld [vmem:[%s1 + $0x10] sm:$0xf]
  %v144 = vld [vmem:[%s1 + $0x14] sm:$0xf]
  %v145 = vld [vmem:[%s1 + $0x18] sm:$0xf]
  %v146 = vld [vmem:[%s1 + $0x1c] sm:$0xf]
  %v147 = vld [vmem:[%s1 + $0x20] sm:$0xf]
  %v148 = vld [vmem:[%s1 + $0x24] sm:$0xf]
  %v149 = vld [vmem:[%s1 + $0x28] sm:$0xf]
  %v150 = vld [vmem:[%s1 + $0x2c] sm:$0xf]
  %v151 = vld [vmem:[%s1 + $0x30] sm:$0xf]
  %v152 = vld [vmem:[%s1 + $0x34] sm:$0xf]
  %v153 = vld [vmem:[%s1 + $0x38] sm:$0xf]
  %v154 = vld [vmem:[%s1 + $0x3c] sm:$0xf]
  %v155 = vld [vmem:[%s1 + $0x40] sm:$0xf]
  %v156 = vld [vmem:[%s1 + $0x44] sm:$0xf]
  %v157 = vld [vmem:[%s1 + $0x48] sm:$0xf]
  %v158 = vld [vmem:[%s1 + $0x4c] sm:$0xf]
  %v159 = vld [vmem:[%s1 + $0x50] sm:$0xf]
  %v160 = vld [vmem:[%s1 + $0x54] sm:$0xf]
  %v161 = vld [vmem:[%s1 + $0x58] sm:$0xf]
  %v162 = vld [vmem:[%s1 + $0x5c] sm:$0xf]
  %v163 = vld [vmem:[%s1 + $0x60] sm:$0xf]
  %v164 = vld [vmem:[%s1 + $0x64] sm:$0xf]
  %v165 = vld [vmem:[%s1 + $0x68] sm:$0xf]
  %v193 = vunpack.c.l.b16 %v139
  %v194 = vunpack.c.l.b16 %v140
  %v195 = vunpack.c.l.b16 %v141
  %v196 = vunpack.c.l.b16 %v142
  %v197 = vunpack.c.l.b16 %v143
  %v198 = vunpack.c.l.b16 %v144
  %v199 = vunpack.c.l.b16 %v145
  %v200 = vunpack.c.l.b16 %v146
  %v201 = vunpack.c.l.b16 %v147
  %v202 = vunpack.c.l.b16 %v148
  %v203 = vunpack.c.l.b16 %v149
  %v204 = vunpack.c.l.b16 %v150
  %v205 = vunpack.c.l.b16 %v151
  %v206 = vunpack.c.l.b16 %v152
  %v207 = vunpack.c.l.b16 %v153
  %v208 = vunpack.c.l.b16 %v154
  %v209 = vunpack.c.l.b16 %v155
  %v210 = vunpack.c.l.b16 %v156
  %v211 = vunpack.c.l.b16 %v157
  %v212 = vunpack.c.l.b16 %v158
  %v213 = vunpack.c.l.b16 %v159
  %v214 = vunpack.c.l.b16 %v160
  %v215 = vunpack.c.l.b16 %v161
  %v216 = vunpack.c.l.b16 %v162
  %v217 = vunpack.c.l.b16 %v163
  %v218 = vunpack.c.l.b16 %v164
  %v219 = vunpack.c.l.b16 %v165
  %v220 = vpack.c.b16 %v194, %v193
  %v221 = vpack.c.b16 %v196, %v195
  %v222 = vpack.c.b16 %v198, %v197
  %v223 = vpack.c.b16 %v200, %v199
  %v224 = vpack.c.b16 %v202, %v201
  %v225 = vpack.c.b16 %v204, %v203
  %v226 = vpack.c.b16 %v206, %v205
  %v227 = vpack.c.b16 %v208, %v207
  %v228 = vpack.c.b16 %v210, %v209
  %v229 = vpack.c.b16 %v212, %v211
  %v230 = vpack.c.b16 %v214, %v213
  %v231 = vpack.c.b16 %v216, %v215
  %v232 = vpack.c.b16 %v218, %v217
  %v233 = vpack.c.b16 %v219, %v219
  %vm247 = vcmask 719872
  %v248 = vsel %vm247, %v136, 0
  %v250 = vsel %vm247, %v138, 0
  %vm252 = vcmask 1043456
  %v254 = vsel %vm252, %v233, 0
  %256 = vmatprep.subr.bf16.mxu0 0
  %257 = vmatpush1.bf16.msra.mxu0 %v220
  %258 = vmatprep.subr.bf16.mxu0 0
  %259 = vmatpush1.bf16.msra.mxu0 %v221
  %260 = vmatprep.subr.bf16.mxu0 0
  %261 = vmatpush1.bf16.msra.mxu0 %v222
  %262 = vmatprep.subr.bf16.mxu0 0
  %263 = vmatpush1.bf16.msra.mxu0 %v223
  %264 = vmatprep.subr.bf16.mxu0 0
  %265 = vmatpush1.bf16.msra.mxu0 %v224
  %266 = vmatprep.subr.bf16.mxu0 0
  %267 = vmatpush1.bf16.msra.mxu0 %v225
  %268 = vmatprep.subr.bf16.mxu0 0
  %269 = vmatpush1.bf16.msra.mxu0 %v226
  %270 = vmatprep.subr.bf16.mxu0 0
  %271 = vmatpush1.bf16.msra.mxu0 %v227
  %272 = vmatprep.subr.bf16.mxu0 0
  %273 = vmatpush1.bf16.msra.mxu0 %v228
  %274 = vmatprep.subr.bf16.mxu0 0
  %275 = vmatpush1.bf16.msra.mxu0 %v229
  %276 = vmatprep.subr.bf16.mxu0 0
  %277 = vmatpush1.bf16.msra.mxu0 %v230
  %278 = vmatprep.subr.bf16.mxu0 0
  %279 = vmatpush1.bf16.msra.mxu0 %v231
  %280 = vmatprep.subr.bf16.mxu0 0
  %281 = vmatpush1.bf16.msra.mxu0 %v232
  %282 = vmatprep.subr.bf16.mxu0 0
  %283 = vmatpush1.bf16.msra.mxu0 %v254
  %284 = vmatprep.subr.bf16.mxu0 0
  %285 = vmatpush1.bf16.msra.mxu0 0
  %286 = vmatprep.subr.bf16.mxu0 0
  %287 = vmatpush1.bf16.msra.mxu0 0
  %288 = vmatprep.mubr.bf16.mxu0 %v248
  %289 = vmatmul.mubr.bf16.gmra.mrb[0].mxu0 %v128
  %v290 = vpop.f32.mrb[0].mxu0
  %v291 = vadd.f32 0.0, %v290
  %v292 = vpop.f32.mrb[0].mxu0
  %v293 = vpop.f32.mrb[0].mxu0
  %v294 = vadd.f32 0.0, %v293
  %v295 = vpop.f32.mrb[0].mxu0
  %296 = vmatprep.mubr.bf16.mxu0 %v250
  %297 = vmatmul.mubr.bf16.gmra.mrb[0].mxu0 %v132
  %v298 = vpop.f32.mrb[0].mxu0
  %v299 = vadd.f32 0.0, %v298
  %v300 = vpop.f32.mrb[0].mxu0
  %v301 = vpop.f32.mrb[0].mxu0
  %v302 = vadd.f32 0.0, %v301
  %v303 = vpop.f32.mrb[0].mxu0
  %304 = vdwg.mxu0
  %v305 = vpack.c.bf16 %v294, %v291
  %v306 = vpack.c.bf16 %v302, %v299
  %v309 = vunpack.c.l.b16 %v305
  %v310 = vunpack.c.h.b16 %v305
  %v311 = vunpack.c.l.b16 %v306
  %v312 = vunpack.c.h.b16 %v306
  %v313 = vpack.c.b16 %v309, %v309
  %v314 = vpack.c.b16 %v310, %v310
  %v315 = vpack.c.b16 %v311, %v311
  %v316 = vpack.c.b16 %v312, %v312
  %321 = vst [vmem:[%s2] sm:$0xf] %v313
  %322 = vst [vmem:[%s2 + $0x4] sm:$0xf] %v314
  %323 = vst [vmem:[%s2 + $0x8] sm:$0xf] %v315
  %324 = vst [vmem:[%s2 + $0xc] sm:$0xf] %v316
  %v325 = vadd.f32 %v291, %v294
  %v326 = vadd.f32 %v325, %v299
  %v327 = vadd.f32 %v326, %v302
  %328 = vst [vmem:[%s3] sm:$0xff] %v327
  %v329 = vmul.f32 %v291, %v291
  %v330 = vmul.f32 %v294, %v294
  %v331 = vmul.f32 %v299, %v299
  %v332 = vmul.f32 %v302, %v302
  %v333 = vadd.f32 %v329, %v330
  %v334 = vadd.f32 %v333, %v331
  %v335 = vadd.f32 %v334, %v332
  %336 = vst [vmem:[%s4] sm:$0xff] %v335
  // Predicated region
  $region10: #{conv_layer_2d.2} parent=0 // pred_check
    _
  $region11: #{conv_layer_2d.2} parent=0 // pred_check_branch
    %338 = sbr.rel (0) target = $region13
  $region12: #{conv_layer_2d.2} parent=0 // pred_region
    _
  $region13: #{conv_layer_2d.2} parent=0 // pred_fallthru
    _
  // Predicated region
  $region14: #{conv_layer_2d.2} parent=0 // pred_check
    _
  $region15: #{conv_layer_2d.2} parent=0 // pred_check_branch
    %340 = sbr.rel (0) target = $region17
  $region16: #{conv_layer_2d.2} parent=0 // pred_region
    _
  $region17: #{conv_layer_2d.2} parent=0 // pred_fallthru
    _
  // Predicated region
  $region18: #{conv_layer_2d.2} parent=0 // pred_check
    _
  $region19: #{conv_layer_2d.2} parent=0 // pred_check_branch
    %342 = sbr.rel (0) target = $region21
  $region20: #{conv_layer_2d.2} parent=0 // pred_region
    _
  $region21: #{conv_layer_2d.2} parent=0 // pred_fallthru
    _
  // Predicated region
  $region22: #{conv_layer_2d.2} parent=0 // pred_check
    _
  $region23: #{conv_layer_2d.2} parent=0 // pred_check_branch
    %344 = sbr.rel (0) target = $region25
  $region24: #{conv_layer_2d.2} parent=0 // pred_region
    _
  $region25: #{conv_layer_2d.2} parent=0 // pred_fallthru
    _
  // Predicated region
  $region26: #{conv_layer_2d.2} parent=0 // pred_check
    _
  $region27: #{conv_layer_2d.2} parent=0 // pred_check_branch
    %346 = sbr.rel (0) target = $region29
  $region28: #{conv_layer_2d.2} parent=0 // pred_region
    _
  $region29: #{conv_layer_2d.2} parent=0 // pred_fallthru
    _
  // Predicated region
  $region30: #{conv_layer_2d.2} parent=0 // pred_check
    _
  $region31: #{conv_layer_2d.2} parent=0 // pred_check_branch
    %348 = sbr.rel (0) target = $region33
  $region32: #{conv_layer_2d.2} parent=0 // pred_region
    _
  $region33: #{conv_layer_2d.2} parent=0 // pred_fallthru
    _

// kernel: conv_layer_2d.3
$region0: #{conv_layer_2d.3}
  #allocation0 [shape = 'u32[]', space=smem, size = 0x4, offset = 0x4, fixed_abs, tag = 'smem constant byte address 0x4 - core index']
  #allocation1 [shape = 'u32[144,128]{1,0:T(1,128)}', space=vmem, size = 0x12000, scoped, tag = 'internal scratch']
  %s0 = inlined_call_operand.vmem [shape: bf16[32,128], index: 0, kind: input, shape index: {}]
  %s1 = inlined_call_operand.vmem [shape: f32[1,128], index: 1, kind: input, shape index: {}]
  %s2 = inlined_call_operand.vmem [shape: f32[1,128], index: 2, kind: input, shape index: {}]
  %s3 = inlined_call_operand.vmem [shape: f32[32,128], index: 3, kind: output, shape index: {}]
  %s4 = sld [smem:[#allocation0]]
  $region22: #{conv_layer_2d.3} parent=0
    _
  %s6 = ssub.s32 1, %s4
  %s7 = scalar_select 0, %s6, %s4
  // Predicated region
  $region2: #{conv_layer_2d.3} parent=0 // pred_check
    _
  $region3: #{conv_layer_2d.3} parent=0 // pred_check_branch
    %9 = sbr.rel (0) target = $region5
  $region4: #{conv_layer_2d.3} parent=0 // pred_region
    _
  $region5: #{conv_layer_2d.3} parent=0 // pred_fallthru
    _
  // Predicated region
  $region6: #{conv_layer_2d.3} parent=0 // pred_check
    _
  $region7: #{conv_layer_2d.3} parent=0 // pred_check_branch
    %11 = sbr.rel (0) target = $region9
  $region8: #{conv_layer_2d.3} parent=0 // pred_region
    _
  $region9: #{conv_layer_2d.3} parent=0 // pred_fallthru
    _
  // Predicated region
  $region10: #{conv_layer_2d.3} parent=0 // pred_check
    _
  $region11: #{conv_layer_2d.3} parent=0 // pred_check_branch
    %13 = sbr.rel (0) target = $region13
  $region12: #{conv_layer_2d.3} parent=0 // pred_region
    _
  $region13: #{conv_layer_2d.3} parent=0 // pred_fallthru
    _
  %v14 = vld [vmem:[%s0] sm:$0xf]
  %v15 = vld [vmem:[%s0 + $0x4] sm:$0xf]
  %v16 = vld [vmem:[%s0 + $0x8] sm:$0xf]
  %v17 = vld [vmem:[%s0 + $0xc] sm:$0xf]
  %v18 = vunpack.c.l.bf16 %v14
  %v19 = vunpack.c.l.bf16 %v15
  %v20 = vunpack.c.l.bf16 %v16
  %v21 = vunpack.c.l.bf16 %v17
  %v22 = vld [vmem:[%s1] sm:$0x1]
  %v24 = vlaneseq
  %v25 = vshrl.u32 %v24, 7
  %v26 = vsub.s32 0, %v25
  %v27 = vrot.slane %v22, %v26
  %v29 = vmul.f32 %v18, %v27
  %v30 = vmul.f32 %v19, %v27
  %v31 = vmul.f32 %v20, %v27
  %v32 = vmul.f32 %v21, %v27
  %v33 = vld [vmem:[%s2] sm:$0x1]
  %v35 = vlaneseq
  %v36 = vshrl.u32 %v35, 7
  %v37 = vsub.s32 0, %v36
  %v38 = vrot.slane %v33, %v37
  %v40 = vadd.f32 %v29, %v38
  %v41 = vadd.f32 %v30, %v38
  %v42 = vadd.f32 %v31, %v38
  %v43 = vadd.f32 %v32, %v38
  %v44 = vmax.f32 %v40, 0.0
  %v45 = vmax.f32 %v41, 0.0
  %v46 = vmax.f32 %v42, 0.0
  %v47 = vmax.f32 %v43, 0.0
  %48 = vst [vmem:[%s3] sm:$0xff] %v44
  %49 = vst [vmem:[%s3 + $0x8] sm:$0xff] %v45
  %50 = vst [vmem:[%s3 + $0x10] sm:$0xff] %v46
  %51 = vst [vmem:[%s3 + $0x18] sm:$0xff] %v47
  // Predicated region
  $region14: #{conv_layer_2d.3} parent=0 // pred_check
    _
  $region15: #{conv_layer_2d.3} parent=0 // pred_check_branch
    %53 = sbr.rel (0) target = $region17
  $region16: #{conv_layer_2d.3} parent=0 // pred_region
    _
  $region17: #{conv_layer_2d.3} parent=0 // pred_fallthru
    _
  // Predicated region
  $region18: #{conv_layer_2d.3} parent=0 // pred_check
    _
  $region19: #{conv_layer_2d.3} parent=0 // pred_check_branch
    %55 = sbr.rel (0) target = $region21
  $region20: #{conv_layer_2d.3} parent=0 // pred_region
    _
  $region21: #{conv_layer_2d.3} parent=0 // pred_fallthru
    _

</llo_original>
